<compile_context>
chip_gen: v7x
topology: tpu7x:2x2x1
jax: 0.10.0
libtpu: 0.0.40
codegen_flags: <defaults>
</compile_context>

<pallas_src>
import jax
import jax.numpy as jnp
from jax import lax
from jax.experimental import pallas as pl
from jax.experimental.pallas import tpu as pltpu


def _logreg_kernel(x_ref, w_ref, b_ref, o_ref):
    # x_ref: (TB, K)  w_ref: (N, K)  b_ref: (1, N)  o_ref: (TB, N)
    # Contract K (dim 1 of both operands) -> (TB, N); f32 accumulation on MXU.
    z = lax.dot_general(
        x_ref[...], w_ref[...],
        dimension_numbers=(((1,), (1,)), ((), ())),
        preferred_element_type=jnp.float32,
    )
    z = z + b_ref[...].astype(jnp.float32)   # broadcast (1, N) over rows
    o_ref[...] = jax.nn.sigmoid(z).astype(o_ref.dtype)


def _choose_batch_tile(B, K, N, itemsize, budget_bytes=24 << 20, tb_max=1024):
    """Largest batch tile (multiple of 8, capped) fitting the VMEM budget:
    2x(TB*K) [double-buffered x] + N*K [resident W] + 2x(TB*N) [d-buffered out]."""
    tb = min(tb_max, max(8, -(-B // 8) * 8))   # round B up to multiple of 8, cap
    tb = (tb // 8) * 8
    while tb > 8:
        need = itemsize * (2 * tb * K + N * K + 2 * tb * N)
        if need <= budget_bytes:
            break
        tb = max(8, ((tb // 2) // 8) * 8)
    return max(tb, 8)


def logistic_regression_binary(x, weight, bias):
    """x: (B, input_size); weight: (output_size, input_size) [PyTorch layout];
    bias: (output_size,)."""
    B, K = x.shape
    N = weight.shape[0]
    itemsize = jnp.dtype(x.dtype).itemsize

    TB = _choose_batch_tile(B, K, N, itemsize)
    Bp = -(-B // TB) * TB                   # pad batch to a multiple of TB
    xp = x if Bp == B else jnp.pad(x, ((0, Bp - B), (0, 0)))
    b2d = bias.reshape(1, N)

    out = pl.pallas_call(
        _logreg_kernel,
        out_shape=jax.ShapeDtypeStruct((Bp, N), x.dtype),
        grid=(Bp // TB,),
        in_specs=[
            pl.BlockSpec((TB, K), lambda i: (i, 0)),   # streamed, pipelined
            pl.BlockSpec((N, K), lambda i: (0, 0)),    # VMEM-resident weight
            pl.BlockSpec((1, N), lambda i: (0, 0)),    # VMEM-resident bias
        ],
        out_specs=pl.BlockSpec((TB, N), lambda i: (i, 0)),
        compiler_params=pltpu.CompilerParams(
            dimension_semantics=("parallel",),
            vmem_limit_bytes=32 * 1024 * 1024,
        ),
    )(xp, weight, b2d)

    return out[:B] if Bp != B else out


def _reference(x, weight, bias):
    return jax.nn.sigmoid(x @ weight.T + bias)


def _run_case(key, batch, input_size, output_size):
    kx, kw, kb = jax.random.split(key, 3)
    x = jax.random.normal(kx, (batch, input_size), dtype=jnp.float32)
    bound = 1.0 / (input_size ** 0.5)
    weight = jax.random.uniform(kw, (output_size, input_size),
                                minval=-bound, maxval=bound, dtype=jnp.float32)
    bias = jax.random.uniform(kb, (output_size,),
                              minval=-bound, maxval=bound, dtype=jnp.float32)

    out = logistic_regression_binary(x, weight, bias)
    jax.block_until_ready(out)

    ref = _reference(x, weight, bias)
    assert out.shape == (batch, output_size)
    assert jnp.allclose(out, ref, atol=1e-5, rtol=1e-5)


if __name__ == "__main__":
    root = jax.random.PRNGKey(0)
    k1, k2 = jax.random.split(root)

    # Small shape consistent with the module's forward: x (batch, input_size).
    _run_case(k1, batch=8, input_size=32, output_size=2)
    # Larger case exercising multi-step grid + batch padding path.
    _run_case(k2, batch=300, input_size=256, output_size=2)

    print("KERNEL_OK")
</pallas_src>

<mosaic_0001>
module attributes {stable_mosaic.version = 11 : i64} {
  func.func @_logreg_kernel(%arg0: i32, %arg1: memref<8x32xf32, #tpu.memory_space<vmem>>, %arg2: memref<2x32xf32, #tpu.memory_space<vmem>>, %arg3: memref<1x2xf32, #tpu.memory_space<vmem>>, %arg4: memref<8x2xf32, #tpu.memory_space<vmem>>) attributes {dimension_semantics = [#tpu.dimension_semantics<parallel>], iteration_bounds = array<i64: 1>, scalar_prefetch = 0 : i64, scratch_operands = 0 : i64, tpu.core_type = #tpu.core_type<tc>, window_params = [{transform_indices = @transform_0, window_bounds = array<i64: 8, 32>}, {pipeline_mode = #tpu.pipeline_mode<synchronous>, transform_indices = @transform_1, window_bounds = array<i64: 2, 32>}, {pipeline_mode = #tpu.pipeline_mode<synchronous>, transform_indices = @transform_2, window_bounds = array<i64: 1, 2>}, {transform_indices = @transform_3, window_bounds = array<i64: 8, 2>}]} {
    %c0 = arith.constant 0 : index
    %c0_0 = arith.constant 0 : index
    %0 = vector.load %arg1[%c0, %c0_0] : memref<8x32xf32, #tpu.memory_space<vmem>>, vector<8x32xf32>
    %c0_1 = arith.constant 0 : index
    %c0_2 = arith.constant 0 : index
    %1 = vector.load %arg2[%c0_1, %c0_2] : memref<2x32xf32, #tpu.memory_space<vmem>>, vector<2x32xf32>
    %cst = arith.constant dense<0.000000e+00> : vector<8x2xf32>
    %2 = tpu.matmul %0, %1, %cst {dimension_numbers = #tpu.dot_dimension_numbers<[1], [1], [0], [0], [0, 0, 1, 0], [], []>} : vector<8x32xf32>, vector<2x32xf32>, vector<8x2xf32> -> vector<8x2xf32>
    %c0_3 = arith.constant 0 : index
    %c0_4 = arith.constant 0 : index
    %3 = vector.load %arg3[%c0_3, %c0_4] : memref<1x2xf32, #tpu.memory_space<vmem>>, vector<1x2xf32>
    %4 = vector.broadcast %3 : vector<1x2xf32> to vector<8x2xf32>
    %5 = arith.addf %2, %4 : vector<8x2xf32>
    %6 = arith.negf %5 : vector<8x2xf32>
    %7 = math.exp %6 : vector<8x2xf32>
    %cst_5 = arith.constant 1.000000e+00 : f32
    %8 = vector.broadcast %cst_5 : f32 to vector<8x2xf32>
    %9 = arith.addf %8, %7 : vector<8x2xf32>
    %10 = arith.divf %8, %9 : vector<8x2xf32>
    %c0_6 = arith.constant 0 : index
    %c0_7 = arith.constant 0 : index
    %11 = vector.load %arg4[%c0_6, %c0_7] : memref<8x2xf32, #tpu.memory_space<vmem>>, vector<8x2xf32>
    tpu.vector_store %arg4[%c0_6, %c0_7], %10 {strides = array<i32>} : memref<8x2xf32, #tpu.memory_space<vmem>>, vector<8x2xf32>,
    return
  }
  func.func @transform_0(%arg0: i32) -> (i32, i32) {
    %c0_i32 = arith.constant 0 : i32
    %c0_i32_0 = arith.constant 0 : i32
    return %arg0, %c0_i32 : i32, i32
  }
  func.func @transform_1(%arg0: i32) -> (i32, i32) {
    %c0_i32 = arith.constant 0 : i32
    %c0_i32_0 = arith.constant 0 : i32
    %c0_i32_1 = arith.constant 0 : i32
    return %c0_i32, %c0_i32_0 : i32, i32
  }
  func.func @transform_2(%arg0: i32) -> (i32, i32) {
    %c0_i32 = arith.constant 0 : i32
    %c0_i32_0 = arith.constant 0 : i32
    %c0_i32_1 = arith.constant 0 : i32
    return %c0_i32, %c0_i32_0 : i32, i32
  }
  func.func @transform_3(%arg0: i32) -> (i32, i32) {
    %c0_i32 = arith.constant 0 : i32
    %c0_i32_0 = arith.constant 0 : i32
    return %arg0, %c0_i32 : i32, i32
  }
}

</mosaic_0001>

<llo_original>
// kernel: tpu_custom_call.1
$region0: #{tpu_custom_call.1}
  #allocation0 [shape = 'u32[]', space=smem, size = 0x4, offset = 0x4, fixed_abs, tag = 'smem constant byte address 0x4 - core index']
  #allocation1 [shape = 'u32[144,128]{1,0:T(1,128)}', space=vmem, size = 0x12000, scoped, tag = 'internal scratch']
  %s0 = inlined_call_operand.hbm [shape: f32[8,32], index: 0, kind: input, shape index: {}]
  %s1 = inlined_call_operand.vmem [shape: f32[2,32], index: 1, kind: input, shape index: {}]
  %s2 = inlined_call_operand.vmem [shape: f32[1,2], index: 2, kind: input, shape index: {}]
  %s3 = inlined_call_operand.vmem [shape: f32[8,2], index: 3, kind: output, shape index: {}]
  %s4 = sld [smem:[#allocation0]]
  $region26: #{tpu_custom_call.1} parent=0
    _
  %s6 = ssub.s32 1, %s4
  %s7 = scalar_select 0, %s6, %s4
  $region1: #{tpu_custom_call.1} parent=0
    #allocation2 [shape = 'u8[4096]{0}', space=vmem, size = 0x1000, scoped, tag = 'input window, operand 0, single buffered']
    #allocation3 [shape = 's32[1]{0}', space=sflag, size = 0x4, scoped, tag = 'scoped memory for tpu_custom_call.1']
    %8 = vsyncpa [#allocation3], 0
    // Predicated region
    $region2: #{tpu_custom_call.1} parent=1 // pred_check
      _
    $region3: #{tpu_custom_call.1} parent=1 // pred_check_branch
      %10 = sbr.rel (0) target = $region5
    $region4: #{tpu_custom_call.1} parent=1 // pred_region
      %s12 = ssub.s32 128, 128
      %13 = vsyncadd [#allocation3], %s12
      %s15 = sshll.u32 [#allocation2], 4
      %s16 = int_to_ptr.vmem [resolvable:$true] %s15
      %18 = dma.hbm_to_vmem [thread:$0]  %s0, 128, %s16, [#allocation3]
    $region5: #{tpu_custom_call.1} parent=1 // pred_fallthru
      _
    // Predicated region
    $region6: #{tpu_custom_call.1} parent=1 // pred_check
      _
    $region7: #{tpu_custom_call.1} parent=1 // pred_check_branch
      %20 = sbr.rel (0) target = $region9
    $region8: #{tpu_custom_call.1} parent=1 // pred_region
      _
    $region9: #{tpu_custom_call.1} parent=1 // pred_fallthru
      _
    // Predicated region
    $region10: #{tpu_custom_call.1} parent=1 // pred_check
      _
    $region11: #{tpu_custom_call.1} parent=1 // pred_check_branch
      %22 = sbr.rel (0) target = $region13
    $region12: #{tpu_custom_call.1} parent=1 // pred_region
      _
    $region13: #{tpu_custom_call.1} parent=1 // pred_fallthru
      _
    // Predicated region
    $region14: #{tpu_custom_call.1} parent=1 // pred_check
      _
    $region15: #{tpu_custom_call.1} parent=1 // pred_check_branch
      %24 = sbr.rel (0) target = $region17
    $region16: #{tpu_custom_call.1} parent=1 // pred_region
      %25 = dma.done [#allocation3], 128
    $region17: #{tpu_custom_call.1} parent=1 // pred_fallthru
      _
    %v26 = vld [vmem:[#allocation2] sm:$0xff]
    %v27 = vld [vmem:[%s1] sm:$0x3]
    %v28 = vld [vmem:[%s2] sm:$0x1]
    %v30 = vlaneseq
    %v31 = vshrl.u32 %v30, 7
    %v32 = vsub.s32 0, %v31
    %v33 = vrot.slane %v28, %v32
    %vm35 = vcmask 261120
    %v37 = vsel %vm35, %v26, 0
    %v40 = vsel %vm35, %v27, 0
    %42 = vmatprep.subr.mxu0 0.0
    %43 = vmatpush1.xpose.msra.mxu0 %v40
    %44 = vmatprep.subr.mxu0 0.0
    %45 = vmatpush1.xpose.msra.mxu0 0.0
    %46 = vmatprep.subr.mxu0 0.0
    %47 = vmatpush1.xpose.msra.mxu0 0.0
    %48 = vmatprep.subr.mxu0 0.0
    %49 = vmatpush1.xpose.msra.mxu0 0.0
    %50 = vmatprep.subr.mxu0 0.0
    %51 = vmatpush1.xpose.msra.mxu0 0.0
    %52 = vmatprep.subr.mxu0 0.0
    %53 = vmatpush1.xpose.msra.mxu0 0.0
    %54 = vmatprep.subr.mxu0 0.0
    %55 = vmatpush1.xpose.msra.mxu0 0.0
    %56 = vmatprep.subr.mxu0 0.0
    %57 = vmatpush1.xpose.msra.mxu0 0.0
    %58 = vmatprep.subr.mxu0 0.0
    %59 = vmatpush1.xpose.msra.mxu0 0.0
    %60 = vmatprep.subr.mxu0 0.0
    %61 = vmatpush1.xpose.msra.mxu0 0.0
    %62 = vmatprep.subr.mxu0 0.0
    %63 = vmatpush1.xpose.msra.mxu0 0.0
    %64 = vmatprep.subr.mxu0 0.0
    %65 = vmatpush1.xpose.msra.mxu0 0.0
    %66 = vmatprep.subr.mxu0 0.0
    %67 = vmatpush1.xpose.msra.mxu0 0.0
    %68 = vmatprep.subr.mxu0 0.0
    %69 = vmatpush1.xpose.msra.mxu0 0.0
    %70 = vmatprep.subr.mxu0 0.0
    %71 = vmatpush1.xpose.msra.mxu0 0.0
    %72 = vmatprep.subr.mxu0 0.0
    %73 = vmatpush1.xpose.msra.mxu0 0.0
    %74 = vmatprep.subr.mxu0 0.0
    %75 = vmatpush1.xpose.msra.mxu0 0.0
    %76 = vmatprep.subr.mxu0 0.0
    %77 = vmatpush1.xpose.msra.mxu0 0.0
    %78 = vmatprep.subr.mxu0 0.0
    %79 = vmatpush1.xpose.msra.mxu0 0.0
    %80 = vmatprep.subr.mxu0 0.0
    %81 = vmatpush1.xpose.msra.mxu0 0.0
    %82 = vmatprep.subr.mxu0 0.0
    %83 = vmatpush1.xpose.msra.mxu0 0.0
    %84 = vmatprep.subr.mxu0 0.0
    %85 = vmatpush1.xpose.msra.mxu0 0.0
    %86 = vmatprep.subr.mxu0 0.0
    %87 = vmatpush1.xpose.msra.mxu0 0.0
    %88 = vmatprep.subr.mxu0 0.0
    %89 = vmatpush1.xpose.msra.mxu0 0.0
    %90 = vmatprep.subr.mxu0 0.0
    %91 = vmatpush1.xpose.msra.mxu0 0.0
    %92 = vmatprep.subr.mxu0 0.0
    %93 = vmatpush1.xpose.msra.mxu0 0.0
    %94 = vmatprep.subr.mxu0 0.0
    %95 = vmatpush1.xpose.msra.mxu0 0.0
    %96 = vmatprep.subr.mxu0 0.0
    %97 = vmatpush1.xpose.msra.mxu0 0.0
    %98 = vmatprep.subr.mxu0 0.0
    %99 = vmatpush1.xpose.msra.mxu0 0.0
    %100 = vmatprep.subr.mxu0 0.0
    %101 = vmatpush1.xpose.msra.mxu0 0.0
    %102 = vmatprep.subr.mxu0 0.0
    %103 = vmatpush1.xpose.msra.mxu0 0.0
    %104 = vmatprep.subr.mxu0 0.0
    %105 = vmatpush1.xpose.msra.mxu0 0.0
    %106 = vmatprep.mubr.f32.mxu0 0.0
    %107 = vmatmul.mubr.f32.gmra.mrb[0].mxu0 %v37
    %v108 = vpop.f32.mrb[0].mxu0
    %v109 = vadd.f32 %v33, %v108
    %v110 = vpop.f32.mrb[0].mxu0
    %111 = vdwg.mxu0
    %v112 = vxor.u32 %v109, 2147483648
    %v113 = vmul.f32 %v112, 1.442695
    %v114 = vpow.pop %v113
    %v115 = vadd.f32 %v114, 1.0
    %v116 = vrcp.pop %v115
    %v117 = vmul.f32 1.0, %v116
    %vm118 = vcmask 15360
    %119 = vst.msk [vmem:[%s3] sm:$0xff] %vm118, %v117
    // Predicated region
    $region18: #{tpu_custom_call.1} parent=1 // pred_check
      _
    $region19: #{tpu_custom_call.1} parent=1 // pred_check_branch
      %121 = sbr.rel (0) target = $region21
    $region20: #{tpu_custom_call.1} parent=1 // pred_region
      _
    $region21: #{tpu_custom_call.1} parent=1 // pred_fallthru
      _
    // Predicated region
    $region22: #{tpu_custom_call.1} parent=1 // pred_check
      _
    $region23: #{tpu_custom_call.1} parent=1 // pred_check_branch
      %123 = sbr.rel (0) target = $region25
    $region24: #{tpu_custom_call.1} parent=1 // pred_region
      _
    $region25: #{tpu_custom_call.1} parent=1 // pred_fallthru
      _
    %124 = vsyncpa [#allocation3], 1

</llo_original>
